<compile_context>
chip_gen: v7x
topology: tpu7x:2x2x1
jax: 0.10.0
libtpu: 0.0.40
codegen_flags: <defaults>
</compile_context>

<pallas_src>
import jax
import jax.numpy as jnp
from jax.experimental import pallas as pl
from jax.experimental.pallas import tpu as pltpu

_LANE = 128
_SQRT_HALF = 0.7071067811865476


def _round_up(x, m):
    return ((x + m - 1) // m) * m


def _vmem_capacity_bytes():
    try:
        info = pltpu.get_tpu_info()
        cap = int(getattr(info, "vmem_capacity_bytes", 0) or 0)
        if cap > 0:
            return cap
    except Exception:
        pass
    return 64 * 1024 * 1024   # conservative: v7x per-core VMEM


def _erf(z):
    # Abramowitz & Stegun 7.1.26, |err| < 1.5e-7.  exp goes to the EUP; all
    # other ops are plain VPU arithmetic, so this lowers on every TPU gen.
    a1, a2, a3, a4, a5 = (0.254829592, -0.284496736, 1.421413741,
                          -1.453152027, 1.061405429)
    p = 0.3275911
    az = jnp.abs(z)
    t = 1.0 / (1.0 + p * az)
    poly = ((((a5 * t + a4) * t + a3) * t + a2) * t + a1) * t
    e = poly * jnp.exp(-az * az)
    return jnp.where(z >= 0, 1.0 - e, e - 1.0)


def _gelu(x):
    # exact (erf-based) GELU, matching torch.nn.GELU default
    return 0.5 * x * (1.0 + _erf(x * _SQRT_HALF))


# --------------------------------------------------------------------------
# Kernels
# --------------------------------------------------------------------------
def _gate_kernel(x_ref, gw1_ref, gb1_ref, gw2_ref, gb2_ref, gate_ref):
    """softmax(gelu(x @ Wg1 + bg1) @ Wg2 + bg2) for one batch tile."""
    x = x_ref[...]
    gh = jnp.dot(x, gw1_ref[...], preferred_element_type=jnp.float32)
    gh = _gelu(gh + gb1_ref[...]).astype(gw2_ref.dtype)
    # padded expert columns carry a -1e30 bias -> exp underflows to 0 exactly
    logits = jnp.dot(gh, gw2_ref[...],
                     preferred_element_type=jnp.float32) + gb2_ref[...]
    m = jnp.max(logits, axis=-1, keepdims=True)
    e = jnp.exp(logits - m)
    s = jnp.sum(e, axis=-1, keepdims=True)
    gate_ref[...] = (e / s).astype(gate_ref.dtype)   # exact divide (tiny)


def _moe_kernel(x_ref, w1_ref, b1_ref, w2_ref, gp_ref, s_ref, out_ref, *acc):
    """One batch tile x one expert block: fused gated-expert matmul."""
    k = pl.program_id(1)
    x = x_ref[...]                                            # (TB, d_in_p)

    # block-fused first matmul over block_e experts at once
    h = jnp.dot(x, w1_ref[...],
                preferred_element_type=jnp.float32) + b1_ref[...]
    h = _gelu(h)                                              # (TB, be*h_p) f32

    # expand the block's gate columns across each expert's hidden slice via a
    # tiny grid-invariant block-diagonal indicator (no cross-lane relayout)
    g = jnp.dot(gp_ref[...], s_ref[...],
                preferred_element_type=jnp.float32)           # (TB, be*h_p)
    hg = (h * g).astype(w2_ref.dtype)

    part = jnp.dot(hg, w2_ref[...],
                   preferred_element_type=jnp.float32)        # (TB, d_out_p)

    if acc:                     # multiple expert blocks: accumulate over k
        acc_sc = acc[0]

        @pl.when(k == 0)
        def _():
            acc_sc[...] = part

        @pl.when(k > 0)
        def _():
            acc_sc[...] += part

        @pl.when(k == pl.num_programs(1) - 1)
        def _():
            out_ref[...] = acc_sc[...].astype(out_ref.dtype)
    else:                       # single expert block: write directly
        out_ref[...] = part.astype(out_ref.dtype)


# --------------------------------------------------------------------------
# Parameter packing (done once, outside the per-call path)
# --------------------------------------------------------------------------
def pack_params(params, *, compute_dtype=jnp.bfloat16, block_e=None):
    """Pad / fuse / cast the MoE parameters into kernel-friendly layouts."""
    (w1, b1, w2, b2, gw1, gb1, gw2, gb2) = params
    E, d_in, hidden = w1.shape
    d_out = w2.shape[-1]
    h2 = gw1.shape[-1]

    d_in_p = _round_up(d_in, _LANE)
    h_p = _round_up(hidden, _LANE)
    d_out_p = _round_up(d_out, _LANE)
    h2_p = _round_up(h2, _LANE)
    e_p = _round_up(E, _LANE)

    cd = compute_dtype
    f32 = jnp.float32
    cbytes = jnp.dtype(cd).itemsize
    vmem_cap = _vmem_capacity_bytes()

    if block_e is None:
        # largest divisor of E whose double-buffered W1+W2 block fits a
        # conservative slice of VMEM (keeps v7x's 64 MiB happy)
        budget = int(0.45 * vmem_cap)
        per_e = 2 * (d_in_p * h_p + h_p * d_out_p) * cbytes
        block_e = 1
        for be in range(1, E + 1):
            if E % be == 0 and per_e * be <= budget:
                block_e = be
    assert E % block_e == 0

    # expert weights, pre-fused per expert block: (d_in_p, E*h_p) / (E*h_p, d_out_p)
    w1_all = jnp.zeros((E, d_in_p, h_p), cd).at[:, :d_in, :hidden].set(
        w1.astype(cd))
    w1_all = jnp.transpose(w1_all, (1, 0, 2)).reshape(d_in_p, E * h_p)
    b1_all = jnp.zeros((E, h_p), f32).at[:, :hidden].set(
        b1[:, 0, :].astype(f32)).reshape(1, E * h_p)
    w2_all = jnp.zeros((E, h_p, d_out_p), cd).at[:, :hidden, :d_out].set(
        w2.astype(cd)).reshape(E * h_p, d_out_p)
    b2_2d = b2[:, 0, :].astype(f32)                       # (E, d_out), XLA side

    # gate network (separate small kernel)
    gw1p = jnp.zeros((d_in_p, h2_p), cd).at[:d_in, :h2].set(gw1.astype(cd))
    gb1p = jnp.zeros((1, h2_p), f32).at[:, :h2].set(gb1.astype(f32))
    gw2p = jnp.zeros((h2_p, e_p), cd).at[:h2, :E].set(gw2.astype(cd))
    gb2p = jnp.full((1, e_p), -1e30, f32).at[:, :E].set(gb2.astype(f32))

    # grid-invariant block-diagonal indicator: (slot_w, block_e*h_p)
    slot_w = _round_up(block_e, _LANE)
    beh = block_e * h_p
    col_expert = jnp.arange(beh, dtype=jnp.int32) // h_p
    row = jnp.arange(slot_w, dtype=jnp.int32)
    s_blk = (col_expert[None, :] == row[:, None]).astype(f32)

    meta = dict(E=E, d_in=d_in, hidden=hidden, d_out=d_out, h2=h2,
                d_in_p=d_in_p, h_p=h_p, d_out_p=d_out_p, h2_p=h2_p, e_p=e_p,
                block_e=block_e, slot_w=slot_w, compute_dtype=cd,
                vmem_cap_bytes=vmem_cap)
    return dict(w1_all=w1_all, b1_all=b1_all, w2_all=w2_all, b2_2d=b2_2d,
                gw1p=gw1p, gb1p=gb1p, gw2p=gw2p, gb2p=gb2p, s_blk=s_blk,
                meta=meta)


# --------------------------------------------------------------------------
# Forward
# --------------------------------------------------------------------------
def moe_forward(x, packed, *, block_b=None):
    """Pallas MoE forward.  x: (B, d_in); `packed` from pack_params()."""
    meta = packed["meta"]
    B, d_in = x.shape
    assert d_in == meta["d_in"]

    cd = meta["compute_dtype"]
    cbytes = jnp.dtype(cd).itemsize
    d_in_p, h_p, d_out_p = meta["d_in_p"], meta["h_p"], meta["d_out_p"]
    h2_p, e_p = meta["h2_p"], meta["e_p"]
    E, block_e, slot_w = meta["E"], meta["block_e"], meta["slot_w"]
    d_out = meta["d_out"]
    n_e = E // block_e
    beh = block_e * h_p

    # batch tiling: big tiles for arithmetic intensity, but >=2 programs so
    # v7x's two TensorCores both get work on the "parallel" axis
    if block_b is None:
        block_b = min(512, _round_up(B, 8))
        if _round_up(B, block_b) // block_b < 2 and B > 8:
            block_b = _round_up(-(-B // 2), 8)
    block_b = max(8, _round_up(block_b, 8))
    B_p = _round_up(B, block_b)
    n_b = B_p // block_b

    xp = jnp.zeros((B_p, d_in_p), cd).at[:B, :d_in].set(x.astype(cd))

    # --- VMEM limit from actual tile footprint + physical capacity ---
    cap = meta["vmem_cap_bytes"]
    obytes = jnp.dtype(x.dtype).itemsize
    foot_main = (2 * block_b * d_in_p * cbytes          # x
                 + 2 * d_in_p * beh * cbytes            # W1 block
                 + 2 * beh * 4                          # b1 block
                 + 2 * beh * d_out_p * cbytes           # W2 block
                 + 2 * block_b * slot_w * 4             # gate block
                 + 2 * slot_w * beh * 4                 # indicator
                 + 2 * block_b * d_out_p * obytes       # out
                 + block_b * d_out_p * 4)               # acc scratch
    foot_gate = (2 * block_b * d_in_p * cbytes
                 + 2 * d_in_p * h2_p * cbytes + 2 * h2_p * 4
                 + 2 * h2_p * e_p * cbytes + 2 * e_p * 4
                 + 2 * block_b * e_p * 4)
    foot = max(foot_main, foot_gate)
    vmem_limit = int(min(int(0.85 * cap),
                         max(32 << 20, int(1.5 * foot) + (8 << 20))))

    # --- gate kernel: softmax gate, once per batch tile ---
    gate = pl.pallas_call(
        _gate_kernel,
        out_shape=jax.ShapeDtypeStruct((B_p, e_p), jnp.float32),
        grid_spec=pltpu.PrefetchScalarGridSpec(
            num_scalar_prefetch=0,
            grid=(n_b,),
            in_specs=[
                pl.BlockSpec((block_b, d_in_p), lambda i: (i, 0)),
                pl.BlockSpec((d_in_p, h2_p), lambda i: (0, 0)),
                pl.BlockSpec((1, h2_p), lambda i: (0, 0)),
                pl.BlockSpec((h2_p, e_p), lambda i: (0, 0)),
                pl.BlockSpec((1, e_p), lambda i: (0, 0)),
            ],
            out_specs=pl.BlockSpec((block_b, e_p), lambda i: (i, 0)),
        ),
        compiler_params=pltpu.CompilerParams(
            dimension_semantics=("parallel",),
            vmem_limit_bytes=vmem_limit),
    )(xp, packed["gw1p"], packed["gb1p"], packed["gw2p"], packed["gb2p"])

    # pack gate columns into lane-dense 128-wide per-expert-block slots
    g = gate[:, :E].reshape(B_p, n_e, block_e)
    gate_packed = jnp.zeros((B_p, n_e, slot_w), jnp.float32)
    gate_packed = gate_packed.at[:, :, :block_e].set(g)
    gate_packed = gate_packed.reshape(B_p, n_e * slot_w)

    # --- main expert kernel ---
    scratch = [] if n_e == 1 else [pltpu.VMEM((block_b, d_out_p), jnp.float32)]
    out = pl.pallas_call(
        _moe_kernel,
        out_shape=jax.ShapeDtypeStruct((B_p, d_out_p), x.dtype),
        grid_spec=pltpu.PrefetchScalarGridSpec(
            num_scalar_prefetch=0,
            grid=(n_b, n_e),
            in_specs=[
                pl.BlockSpec((block_b, d_in_p), lambda i, k: (i, 0)),   # x
                pl.BlockSpec((d_in_p, beh), lambda i, k: (0, k)),       # W1 blk
                pl.BlockSpec((1, beh), lambda i, k: (0, k)),            # b1 blk
                pl.BlockSpec((beh, d_out_p), lambda i, k: (k, 0)),      # W2 blk
                pl.BlockSpec((block_b, slot_w), lambda i, k: (i, k)),   # gate
                pl.BlockSpec((slot_w, beh), lambda i, k: (0, 0)),       # indic.
            ],
            out_specs=pl.BlockSpec((block_b, d_out_p), lambda i, k: (i, 0)),
            scratch_shapes=scratch,
        ),
        compiler_params=pltpu.CompilerParams(
            dimension_semantics=("parallel", "arbitrary"),
            vmem_limit_bytes=vmem_limit),
    )(xp, packed["w1_all"], packed["b1_all"], packed["w2_all"],
      gate_packed, packed["s_blk"])

    # gated expert output-bias: tiny (B,E)x(E,d_out) matmul, done in XLA
    bias_term = gate[:B, :E] @ packed["b2_2d"]                 # (B, d_out) f32
    result = out[:B, :d_out].astype(jnp.float32) + bias_term
    return result.astype(x.dtype)


# --------------------------------------------------------------------------
# Reference + init
# --------------------------------------------------------------------------
def moe_reference(x, params):
    """Pure-JAX reference matching the PyTorch forward (exact erf GELU)."""
    (w1, b1, w2, b2, gw1, gb1, gw2, gb2) = params
    gh = jax.nn.gelu(x @ gw1 + gb1, approximate=False)
    gate = jax.nn.softmax(gh @ gw2 + gb2, axis=-1)             # (B, E)
    h = jax.nn.gelu(jnp.einsum('bd,edh->beh', x, w1) + b1[:, 0][None, :, :],
                    approximate=False)
    eo = jnp.einsum('beh,eho->beo', h, w2) + b2[:, 0][None, :, :]
    return jnp.sum(gate[..., None] * eo, axis=1)


def init_params(key, input_dim, hidden_dim, output_dim, num_experts):
    """Deterministic synthetic parameter init (weights stored as (in, out))."""
    ks = jax.random.split(key, 8)
    s = 0.1
    w1 = s * jax.random.normal(ks[0], (num_experts, input_dim, hidden_dim), jnp.float32)
    b1 = s * jax.random.normal(ks[1], (num_experts, 1, hidden_dim), jnp.float32)
    w2 = s * jax.random.normal(ks[2], (num_experts, hidden_dim, output_dim), jnp.float32)
    b2 = s * jax.random.normal(ks[3], (num_experts, 1, output_dim), jnp.float32)
    gw1 = s * jax.random.normal(ks[4], (input_dim, hidden_dim // 2), jnp.float32)
    gb1 = s * jax.random.normal(ks[5], (1, hidden_dim // 2), jnp.float32)
    gw2 = s * jax.random.normal(ks[6], (hidden_dim // 2, num_experts), jnp.float32)
    gb2 = s * jax.random.normal(ks[7], (1, num_experts), jnp.float32)
    return (w1, b1, w2, b2, gw1, gb1, gw2, gb2)


if __name__ == "__main__":
    B, D_IN, HIDDEN, D_OUT, E = 20, 32, 32, 16, 4   # small demo shapes

    key = jax.random.PRNGKey(0)
    kx, kp = jax.random.split(key)
    x = jax.random.normal(kx, (B, D_IN), jnp.float32)
    params = init_params(kp, D_IN, HIDDEN, D_OUT, E)
    ref = moe_reference(x, params)

    # 1) f32 compute path, block_e=2 -> exercises the expert-block
    #    accumulation ("arbitrary") axis; tight tolerance.
    packed_f32 = pack_params(params, compute_dtype=jnp.float32, block_e=2)
    out_f32 = jax.block_until_ready(moe_forward(x, packed_f32))
    assert out_f32.shape == (B, D_OUT)
    assert jnp.allclose(out_f32, ref, rtol=1e-4, atol=1e-4), (
        f"f32 path max abs err = {jnp.max(jnp.abs(out_f32 - ref))}")

    # 2) bf16 compute path (default) -> exercises the single-expert-block
    #    fast path and the bf16 MXU packing; bf16-appropriate tolerance.
    packed_bf16 = pack_params(params)    # compute_dtype=bf16, block_e auto
    out_bf16 = jax.block_until_ready(moe_forward(x, packed_bf16))
    assert out_bf16.shape == (B, D_OUT)
    assert jnp.allclose(out_bf16, ref, rtol=3e-2, atol=3e-2), (
        f"bf16 path max abs err = {jnp.max(jnp.abs(out_bf16 - ref))}")

    print("KERNEL_OK")
</pallas_src>

<mosaic_0001>
module attributes {stable_mosaic.version = 11 : i64} {
  func.func @_gate_kernel(%arg0: i32, %arg1: memref<16x128xf32, #tpu.memory_space<vmem>>, %arg2: memref<128x128xf32, #tpu.memory_space<vmem>>, %arg3: memref<1x128xf32, #tpu.memory_space<vmem>>, %arg4: memref<128x128xf32, #tpu.memory_space<vmem>>, %arg5: memref<1x128xf32, #tpu.memory_space<vmem>>, %arg6: memref<16x128xf32, #tpu.memory_space<vmem>>) attributes {dimension_semantics = [#tpu.dimension_semantics<parallel>], iteration_bounds = array<i64: 2>, scalar_prefetch = 0 : i64, scratch_operands = 0 : i64, tpu.core_type = #tpu.core_type<tc>, window_params = [{transform_indices = @transform_0, window_bounds = array<i64: 16, 128>}, {pipeline_mode = #tpu.pipeline_mode<synchronous>, transform_indices = @transform_1, window_bounds = array<i64: 128, 128>}, {pipeline_mode = #tpu.pipeline_mode<synchronous>, transform_indices = @transform_2, window_bounds = array<i64: 1, 128>}, {pipeline_mode = #tpu.pipeline_mode<synchronous>, transform_indices = @transform_3, window_bounds = array<i64: 128, 128>}, {pipeline_mode = #tpu.pipeline_mode<synchronous>, transform_indices = @transform_4, window_bounds = array<i64: 1, 128>}, {transform_indices = @transform_5, window_bounds = array<i64: 16, 128>}]} {
    %c0 = arith.constant 0 : index
    %c0_0 = arith.constant 0 : index
    %0 = vector.load %arg1[%c0, %c0_0] : memref<16x128xf32, #tpu.memory_space<vmem>>, vector<16x128xf32>
    %c0_1 = arith.constant 0 : index
    %c0_2 = arith.constant 0 : index
    %1 = vector.load %arg2[%c0_1, %c0_2] : memref<128x128xf32, #tpu.memory_space<vmem>>, vector<128x128xf32>
    %cst = arith.constant dense<0.000000e+00> : vector<16x128xf32>
    %2 = tpu.matmul %0, %1, %cst {dimension_numbers = #tpu.dot_dimension_numbers<[1], [0], [0], [1], [0, 0, 1, 1], [], []>} : vector<16x128xf32>, vector<128x128xf32>, vector<16x128xf32> -> vector<16x128xf32>
    %c0_3 = arith.constant 0 : index
    %c0_4 = arith.constant 0 : index
    %3 = vector.load %arg3[%c0_3, %c0_4] : memref<1x128xf32, #tpu.memory_space<vmem>>, vector<1x128xf32>
    %4 = vector.broadcast %3 : vector<1x128xf32> to vector<16x128xf32>
    %5 = arith.addf %2, %4 : vector<16x128xf32>
    %cst_5 = arith.constant 5.000000e-01 : f32
    %6 = vector.broadcast %cst_5 : f32 to vector<16x128xf32>
    %7 = arith.mulf %6, %5 : vector<16x128xf32>
    %cst_6 = arith.constant 0.707106769 : f32
    %8 = vector.broadcast %cst_6 : f32 to vector<16x128xf32>
    %9 = arith.mulf %5, %8 : vector<16x128xf32>
    %10 = math.absf %9 : vector<16x128xf32>
    %cst_7 = arith.constant 0.327591091 : f32
    %11 = vector.broadcast %cst_7 : f32 to vector<16x128xf32>
    %12 = arith.mulf %11, %10 : vector<16x128xf32>
    %cst_8 = arith.constant 1.000000e+00 : f32
    %13 = vector.broadcast %cst_8 : f32 to vector<16x128xf32>
    %14 = arith.addf %13, %12 : vector<16x128xf32>
    %cst_9 = arith.constant 1.000000e+00 : f32
    %15 = vector.broadcast %cst_9 : f32 to vector<16x128xf32>
    %16 = arith.divf %15, %14 : vector<16x128xf32>
    %cst_10 = arith.constant 1.06140542 : f32
    %17 = vector.broadcast %cst_10 : f32 to vector<16x128xf32>
    %18 = arith.mulf %17, %16 : vector<16x128xf32>
    %cst_11 = arith.constant -1.45315206 : f32
    %19 = vector.broadcast %cst_11 : f32 to vector<16x128xf32>
    %20 = arith.addf %18, %19 : vector<16x128xf32>
    %21 = arith.mulf %20, %16 : vector<16x128xf32>
    %cst_12 = arith.constant 1.42141378 : f32
    %22 = vector.broadcast %cst_12 : f32 to vector<16x128xf32>
    %23 = arith.addf %21, %22 : vector<16x128xf32>
    %24 = arith.mulf %23, %16 : vector<16x128xf32>
    %cst_13 = arith.constant -0.284496725 : f32
    %25 = vector.broadcast %cst_13 : f32 to vector<16x128xf32>
    %26 = arith.addf %24, %25 : vector<16x128xf32>
    %27 = arith.mulf %26, %16 : vector<16x128xf32>
    %cst_14 = arith.constant 0.254829586 : f32
    %28 = vector.broadcast %cst_14 : f32 to vector<16x128xf32>
    %29 = arith.addf %27, %28 : vector<16x128xf32>
    %30 = arith.mulf %29, %16 : vector<16x128xf32>
    %cst_15 = arith.constant 0.000000e+00 : f32
    %31 = vector.broadcast %cst_15 : f32 to vector<16x128xf32>
    %32 = arith.subf %31, %10 : vector<16x128xf32>
    %33 = arith.mulf %32, %10 : vector<16x128xf32>
    %34 = math.exp %33 : vector<16x128xf32>
    %35 = arith.mulf %30, %34 : vector<16x128xf32>
    %cst_16 = arith.constant 0.000000e+00 : f32
    %36 = vector.broadcast %cst_16 : f32 to vector<16x128xf32>
    %37 = arith.cmpf oge, %9, %36 : vector<16x128xf32>
    %cst_17 = arith.constant 1.000000e+00 : f32
    %38 = vector.broadcast %cst_17 : f32 to vector<16x128xf32>
    %39 = arith.subf %38, %35 : vector<16x128xf32>
    %cst_18 = arith.constant 1.000000e+00 : f32
    %40 = vector.broadcast %cst_18 : f32 to vector<16x128xf32>
    %41 = arith.subf %35, %40 : vector<16x128xf32>
    %42 = arith.select %37, %39, %41 : vector<16x128xi1>, vector<16x128xf32>
    %cst_19 = arith.constant 1.000000e+00 : f32
    %43 = vector.broadcast %cst_19 : f32 to vector<16x128xf32>
    %44 = arith.addf %43, %42 : vector<16x128xf32>
    %45 = arith.mulf %7, %44 : vector<16x128xf32>
    %c0_20 = arith.constant 0 : index
    %c0_21 = arith.constant 0 : index
    %46 = vector.load %arg4[%c0_20, %c0_21] : memref<128x128xf32, #tpu.memory_space<vmem>>, vector<128x128xf32>
    %cst_22 = arith.constant dense<0.000000e+00> : vector<16x128xf32>
    %47 = tpu.matmul %45, %46, %cst_22 {dimension_numbers = #tpu.dot_dimension_numbers<[1], [0], [0], [1], [0, 0, 1, 1], [], []>} : vector<16x128xf32>, vector<128x128xf32>, vector<16x128xf32> -> vector<16x128xf32>
    %c0_23 = arith.constant 0 : index
    %c0_24 = arith.constant 0 : index
    %48 = vector.load %arg5[%c0_23, %c0_24] : memref<1x128xf32, #tpu.memory_space<vmem>>, vector<1x128xf32>
    %49 = vector.broadcast %48 : vector<1x128xf32> to vector<16x128xf32>
    %50 = arith.addf %47, %49 : vector<16x128xf32>
    %cst_25 = arith.constant dense<0xFF800000> : vector<16xf32>
    %51 = vector.multi_reduction <maximumf>, %50, %cst_25 [1] : vector<16x128xf32> to vector<16xf32>
    %52 = vector.shape_cast %51 : vector<16xf32> to vector<16x1xf32>
    %53 = vector.broadcast %52 : vector<16x1xf32> to vector<16x128xf32>
    %54 = arith.subf %50, %53 : vector<16x128xf32>
    %55 = math.exp %54 : vector<16x128xf32>
    %cst_26 = arith.constant dense<0.000000e+00> : vector<16xf32>
    %56 = vector.multi_reduction <add>, %55, %cst_26 [1] : vector<16x128xf32> to vector<16xf32>
    %57 = vector.shape_cast %56 : vector<16xf32> to vector<16x1xf32>
    %58 = vector.broadcast %57 : vector<16x1xf32> to vector<16x128xf32>
    %59 = arith.divf %55, %58 : vector<16x128xf32>
    %c0_27 = arith.constant 0 : index
    %c0_28 = arith.constant 0 : index
    %60 = vector.load %arg6[%c0_27, %c0_28] : memref<16x128xf32, #tpu.memory_space<vmem>>, vector<16x128xf32>
    tpu.vector_store %arg6[%c0_27, %c0_28], %59 {strides = array<i32>} : memref<16x128xf32, #tpu.memory_space<vmem>>, vector<16x128xf32>,
    return
  }
  func.func @transform_0(%arg0: i32) -> (i32, i32) {
    %c0_i32 = arith.constant 0 : i32
    %c0_i32_0 = arith.constant 0 : i32
    return %arg0, %c0_i32 : i32, i32
  }
  func.func @transform_1(%arg0: i32) -> (i32, i32) {
    %c0_i32 = arith.constant 0 : i32
    %c0_i32_0 = arith.constant 0 : i32
    %c0_i32_1 = arith.constant 0 : i32
    return %c0_i32, %c0_i32_0 : i32, i32
  }
  func.func @transform_2(%arg0: i32) -> (i32, i32) {
    %c0_i32 = arith.constant 0 : i32
    %c0_i32_0 = arith.constant 0 : i32
    %c0_i32_1 = arith.constant 0 : i32
    return %c0_i32, %c0_i32_0 : i32, i32
  }
  func.func @transform_3(%arg0: i32) -> (i32, i32) {
    %c0_i32 = arith.constant 0 : i32
    %c0_i32_0 = arith.constant 0 : i32
    %c0_i32_1 = arith.constant 0 : i32
    return %c0_i32, %c0_i32_0 : i32, i32
  }
  func.func @transform_4(%arg0: i32) -> (i32, i32) {
    %c0_i32 = arith.constant 0 : i32
    %c0_i32_0 = arith.constant 0 : i32
    %c0_i32_1 = arith.constant 0 : i32
    return %c0_i32, %c0_i32_0 : i32, i32
  }
  func.func @transform_5(%arg0: i32) -> (i32, i32) {
    %c0_i32 = arith.constant 0 : i32
    %c0_i32_0 = arith.constant 0 : i32
    return %arg0, %c0_i32 : i32, i32
  }
}

</mosaic_0001>

<llo_original>
// kernel: tpu_custom_call.1
$region0: #{tpu_custom_call.1}
  #allocation0 [shape = 'u32[]', space=smem, size = 0x4, offset = 0x4, fixed_abs, tag = 'smem constant byte address 0x4 - core index']
  #allocation1 [shape = 'u32[144,128]{1,0:T(1,128)}', space=vmem, size = 0x12000, scoped, tag = 'internal scratch']
  %s0 = inlined_call_operand.hbm [shape: f32[32,128], index: 0, kind: input, shape index: {}]
  %s1 = inlined_call_operand.hbm [shape: f32[128,128], index: 1, kind: input, shape index: {}]
  %s2 = inlined_call_operand.vmem [shape: f32[1,128], index: 2, kind: input, shape index: {}]
  %s3 = inlined_call_operand.hbm [shape: f32[128,128], index: 3, kind: input, shape index: {}]
  %s4 = inlined_call_operand.vmem [shape: f32[1,128], index: 4, kind: input, shape index: {}]
  %s5 = inlined_call_operand.hbm [shape: f32[32,128], index: 5, kind: output, shape index: {}]
  %s6 = sld [smem:[#allocation0]]
  $region65: #{tpu_custom_call.1} parent=0
    _
  %s8 = ssub.s32 1, %s6
  %s9 = scalar_select 0, %s8, %s6
  $region1: #{tpu_custom_call.1} parent=0
    #allocation2 [shape = 'u8[16384]{0}', space=vmem, size = 0x4000, scoped, tag = 'input window, operand 0']
    #allocation3 [shape = 's32[2]{0}', space=sflag, size = 0x8, scoped, tag = 'scoped memory for tpu_custom_call.1']
    #allocation4 [shape = 's32[2]{0}', space=sflag, size = 0x8, scoped, tag = 'scoped memory for tpu_custom_call.1']
    #allocation5 [shape = 'u8[65536]{0}', space=vmem, size = 0x10000, scoped, tag = 'input window, operand 1, single buffered']
    #allocation6 [shape = 's32[1]{0}', space=sflag, size = 0x4, scoped, tag = 'scoped memory for tpu_custom_call.1']
    #allocation7 [shape = 'u8[65536]{0}', space=vmem, size = 0x10000, scoped, tag = 'input window, operand 3, single buffered']
    #allocation8 [shape = 'u8[16384]{0}', space=vmem, size = 0x4000, scoped, tag = 'output window, operand 0']
    %10 = vsyncpa [#allocation3], 0
    %s11 = scalar_lea.sflag [#allocation3], 1
    %12 = vsyncpa %s11, 0
    %13 = vsyncpa [#allocation6], 0
    %14 = vsyncpa [#allocation4], 0
    %s15 = scalar_lea.sflag [#allocation4], 1
    %16 = vsyncpa %s15, 0
    loop: start=0, step=1, limit=4
    $region2: #{tpu_custom_call.1} parent=1 // loop_pre_header
      _
    $region3: #{tpu_custom_call.1} parent=1 // loop_header
      %s18 = sphi 0, %s22
      %p19 = scmp.ge.s32.totalorder %s18, 4
      %s28 = sphi 0, %s30
      %s31 = sphi 0, %s28
      %s32 = sphi 0, %s31
      %s48 = sphi 0, %s32
      %s52 = sphi 0, %s52
      %s54 = sphi 0, %s52
      %s55 = sphi 0, %s54
      %s69 = sphi 0, %s55
      %s73 = sphi 0, %s73
      %s75 = sphi 0, %s73
      %s76 = sphi 0, %s75
      %s90 = sphi 0, %s76
      %s94 = sphi 0, %s94
      %s96 = sphi 0, %s94
      %s97 = sphi 0, %s96
      %s111 = sphi 0, %s97
      %s115 = sphi 0, %s115
      %s117 = sphi 0, %s115
      %s118 = sphi 0, %s117
      %s132 = sphi 0, %s118
      %s138 = sphi 0, %s140
      %s141 = sphi 0, %s138
      %s142 = sphi 0, %s141
      %s158 = sphi 0, %s142
    $region4: #{tpu_custom_call.1} parent=1 // loop_header_branch
      %21 = sbr.rel (%p19) target = $region8
    $region5: #{tpu_custom_call.1} parent=1 // loop_body
      %s23 = ssub.s32 %s18, 1
      %s24 = ssub.s32 %s18, 2
      %s25 = sadd.s32 %s18, 1
      %s26 = ssub.s32 %s18, %s25
      %p27 = scmp.eq.s32.totalorder %s26, 0
      %s29 = sadd.s32 %s28, 1
      %s30 = scalar_select %p27, %s28, %s29
      %p33 = pneg %p27
      %p34 = scmp.eq.s32.totalorder %s18, 1
      %p35 = por %p33, %p34
      %p36 = scmp.ne.s32.totalorder %s28, %s31
      %p37 = scmp.eq.s32.totalorder %s18, 0
      %p38 = por %p36, %p37
      %p39 = scmp.ne.s32.totalorder %s28, %s31
      %p40 = scmp.eq.s32.totalorder %s23, 1
      %p41 = por %p39, %p40
      %p42 = scmp.ne.s32.totalorder %s31, %s32
      %p43 = scmp.eq.s32.totalorder %s23, 0
      %p44 = por %p42, %p43
      %p45 = scmp.ne.s32.totalorder %s31, %s32
      %p46 = scmp.eq.s32.totalorder %s24, 1
      %p47 = por %p45, %p46
      %p49 = scmp.ne.s32.totalorder %s32, %s48
      %p50 = scmp.eq.s32.totalorder %s24, 0
      %p51 = por %p49, %p50
      %s53 = sadd.s32 %s52, 1
      %p56 = scmp.eq.s32.totalorder %s18, 1
      %p57 = scmp.ne.s32.totalorder %s52, %s54
      %p58 = scmp.eq.s32.totalorder %s18, 0
      %p59 = por %p57, %p58
      %p60 = scmp.ne.s32.totalorder %s52, %s54
      %p61 = scmp.eq.s32.totalorder %s23, 1
      %p62 = por %p60, %p61
      %p63 = scmp.ne.s32.totalorder %s54, %s55
      %p64 = scmp.eq.s32.totalorder %s23, 0
      %p65 = por %p63, %p64
      %p66 = scmp.ne.s32.totalorder %s54, %s55
      %p67 = scmp.eq.s32.totalorder %s24, 1
      %p68 = por %p66, %p67
      %p70 = scmp.ne.s32.totalorder %s55, %s69
      %p71 = scmp.eq.s32.totalorder %s24, 0
      %p72 = por %p70, %p71
      %s74 = sadd.s32 %s73, 1
      %p77 = scmp.eq.s32.totalorder %s18, 1
      %p78 = scmp.ne.s32.totalorder %s73, %s75
      %p79 = scmp.eq.s32.totalorder %s18, 0
      %p80 = por %p78, %p79
      %p81 = scmp.ne.s32.totalorder %s73, %s75
      %p82 = scmp.eq.s32.totalorder %s23, 1
      %p83 = por %p81, %p82
      %p84 = scmp.ne.s32.totalorder %s75, %s76
      %p85 = scmp.eq.s32.totalorder %s23, 0
      %p86 = por %p84, %p85
      %p87 = scmp.ne.s32.totalorder %s75, %s76
      %p88 = scmp.eq.s32.totalorder %s24, 1
      %p89 = por %p87, %p88
      %p91 = scmp.ne.s32.totalorder %s76, %s90
      %p92 = scmp.eq.s32.totalorder %s24, 0
      %p93 = por %p91, %p92
      %s95 = sadd.s32 %s94, 1
      %p98 = scmp.eq.s32.totalorder %s18, 1
      %p99 = scmp.ne.s32.totalorder %s94, %s96
      %p100 = scmp.eq.s32.totalorder %s18, 0
      %p101 = por %p99, %p100
      %p102 = scmp.ne.s32.totalorder %s94, %s96
      %p103 = scmp.eq.s32.totalorder %s23, 1
      %p104 = por %p102, %p103
      %p105 = scmp.ne.s32.totalorder %s96, %s97
      %p106 = scmp.eq.s32.totalorder %s23, 0
      %p107 = por %p105, %p106
      %p108 = scmp.ne.s32.totalorder %s96, %s97
      %p109 = scmp.eq.s32.totalorder %s24, 1
      %p110 = por %p108, %p109
      %p112 = scmp.ne.s32.totalorder %s97, %s111
      %p113 = scmp.eq.s32.totalorder %s24, 0
      %p114 = por %p112, %p113
      %s116 = sadd.s32 %s115, 1
      %p119 = scmp.eq.s32.totalorder %s18, 1
      %p120 = scmp.ne.s32.totalorder %s115, %s117
      %p121 = scmp.eq.s32.totalorder %s18, 0
      %p122 = por %p120, %p121
      %p123 = scmp.ne.s32.totalorder %s115, %s117
      %p124 = scmp.eq.s32.totalorder %s23, 1
      %p125 = por %p123, %p124
      %p126 = scmp.ne.s32.totalorder %s117, %s118
      %p127 = scmp.eq.s32.totalorder %s23, 0
      %p128 = por %p126, %p127
      %p129 = scmp.ne.s32.totalorder %s117, %s118
      %p130 = scmp.eq.s32.totalorder %s24, 1
      %p131 = por %p129, %p130
      %p133 = scmp.ne.s32.totalorder %s118, %s132
      %p134 = scmp.eq.s32.totalorder %s24, 0
      %p135 = por %p133, %p134
      %s136 = ssub.s32 %s18, %s25
      %p137 = scmp.eq.s32.totalorder %s136, 0
      %s139 = sadd.s32 %s138, 1
      %s140 = scalar_select %p137, %s138, %s139
      %p143 = pneg %p137
      %p144 = scmp.eq.s32.totalorder %s18, 1
      %p145 = por %p143, %p144
      %p146 = scmp.ne.s32.totalorder %s138, %s141
      %p147 = scmp.eq.s32.totalorder %s18, 0
      %p148 = por %p146, %p147
      %p149 = scmp.ne.s32.totalorder %s138, %s141
      %p150 = scmp.eq.s32.totalorder %s23, 1
      %p151 = por %p149, %p150
      %p152 = scmp.ne.s32.totalorder %s141, %s142
      %p153 = scmp.eq.s32.totalorder %s23, 0
      %p154 = por %p152, %p153
      %p155 = scmp.ne.s32.totalorder %s141, %s142
      %p156 = scmp.eq.s32.totalorder %s24, 1
      %p157 = por %p155, %p156
      %p159 = scmp.ne.s32.totalorder %s142, %s158
      %p160 = scmp.eq.s32.totalorder %s24, 0
      %p161 = por %p159, %p160
      %p162 = scmp.le.s32.totalorder 1, %s18
      %p163 = scmp.lt.s32.totalorder %s18, 3
      %p164 = pnand %p162, %p163
      %p165 = pneg %p164
      // Predicated region
      $region9: #{tpu_custom_call.1} parent=5 // pred_check
        _
      $region10: #{tpu_custom_call.1} parent=5 // pred_check_branch
        %167 = sbr.rel (%p164) target = $region12
      $region11: #{tpu_custom_call.1} parent=5 // pred_region
        %s168 = ssub.s32 %s18, 1
        // Predicated region
        $region13: #{tpu_custom_call.1} parent=11 // pred_check
          %p169 = pneg %p65
        $region14: #{tpu_custom_call.1} parent=11 // pred_check_branch
          %171 = sbr.rel (%p169) target = $region16
        $region15: #{tpu_custom_call.1} parent=11 // pred_region
          %s173 = ssub.s32 2048, 2048
          %174 = vsyncadd [#allocation6], %s173
          %s175 = sshll.u32 [#allocation5], 4
          %s176 = int_to_ptr.vmem [resolvable:$true] %s175
          %181 = dma.hbm_to_vmem [thread:$0]  %s1, 2048, %s176, [#allocation6], 128, 128, 8
        $region16: #{tpu_custom_call.1} parent=11 // pred_fallthru
          _
        // Predicated region
        $region17: #{tpu_custom_call.1} parent=11 // pred_check
          %p182 = pneg %p86
        $region18: #{tpu_custom_call.1} parent=11 // pred_check_branch
          %184 = sbr.rel (%p182) target = $region20
        $region19: #{tpu_custom_call.1} parent=11 // pred_region
          _
        $region20: #{tpu_custom_call.1} parent=11 // pred_fallthru
          _
        // Predicated region
        $region21: #{tpu_custom_call.1} parent=11 // pred_check
          %p185 = pneg %p107
        $region22: #{tpu_custom_call.1} parent=11 // pred_check_branch
          %187 = sbr.rel (%p185) target = $region24
        $region23: #{tpu_custom_call.1} parent=11 // pred_region
          %s189 = ssub.s32 2048, 2048
          %190 = vsyncadd [#allocation6], %s189
          %s191 = sshll.u32 [#allocation7], 4
          %s192 = int_to_ptr.vmem [resolvable:$true] %s191
          %197 = dma.hbm_to_vmem [thread:$0]  %s3, 2048, %s192, [#allocation6], 128, 128, 8
        $region24: #{tpu_custom_call.1} parent=11 // pred_fallthru
          _
        // Predicated region
        $region25: #{tpu_custom_call.1} parent=11 // pred_check
          %p198 = pneg %p128
        $region26: #{tpu_custom_call.1} parent=11 // pred_check_branch
          %200 = sbr.rel (%p198) target = $region28
        $region27: #{tpu_custom_call.1} parent=11 // pred_region
          _
        $region28: #{tpu_custom_call.1} parent=11 // pred_fallthru
          _
      $region12: #{tpu_custom_call.1} parent=5 // pred_fallthru
        _
      %p201 = scmp.lt.s32.totalorder %s18, 2
      // Predicated region
      $region29: #{tpu_custom_call.1} parent=5 // pred_check
        %p202 = pneg %p201
      $region30: #{tpu_custom_call.1} parent=5 // pred_check_branch
        %204 = sbr.rel (%p202) target = $region32
      $region31: #{tpu_custom_call.1} parent=5 // pred_region
        // Predicated region
        $region33: #{tpu_custom_call.1} parent=31 // pred_check
          %p205 = pneg %p38
        $region34: #{tpu_custom_call.1} parent=31 // pred_check_branch
          %207 = sbr.rel (%p205) target = $region36
        $region35: #{tpu_custom_call.1} parent=31 // pred_region
          %s208 = sand.u32 %s28, 1
          %s209 = scalar_lea.sflag [#allocation3], %s208
          %s210 = sand.u32 %s28, 1
          %s211 = smul.addr %s210, 16
          %s212 = scalar_lea.vmem [#allocation2], %s211
          %s213 = smul.u32 2, %s18
          %s215 = ssub.s32 256, 256
          %216 = vsyncadd %s209, %s215
          %s217 = smul.addr %s213, 128
          %s218 = scalar_lea.hbm %s0, %s217
          %s219 = sshll.u32 %s212, 4
          %s220 = int_to_ptr.vmem [resolvable:$true] %s219
          %225 = dma.hbm_to_vmem [thread:$0]  %s218, 256, %s220, %s209, 128, 128, 8
        $region36: #{tpu_custom_call.1} parent=31 // pred_fallthru
          _
      $region32: #{tpu_custom_call.1} parent=5 // pred_fallthru
        _
      %p226 = scmp.le.s32.totalorder 1, %s18
      %p227 = scmp.lt.s32.totalorder %s18, 3
      %p228 = pnand %p226, %p227
      %p229 = pneg %p228
      // Predicated region
      $region37: #{tpu_custom_call.1} parent=5 // pred_check
        _
      $region38: #{tpu_custom_call.1} parent=5 // pred_check_branch
        %231 = sbr.rel (%p228) target = $region40
      $region39: #{tpu_custom_call.1} parent=5 // pred_region
        %s232 = ssub.s32 %s18, 1
        %s233 = sand.u32 %s31, 1
        %s234 = scalar_lea.sflag [#allocation3], %s233
        %s235 = sand.u32 %s31, 1
        %s236 = smul.addr %s235, 16
        %s237 = scalar_lea.vmem [#allocation2], %s236
        // Predicated region
        $region41: #{tpu_custom_call.1} parent=39 // pred_check
          %p238 = pneg %p44
        $region42: #{tpu_custom_call.1} parent=39 // pred_check_branch
          %240 = sbr.rel (%p238) target = $region44
        $region43: #{tpu_custom_call.1} parent=39 // pred_region
          %241 = dma.done %s234, 256
        $region44: #{tpu_custom_call.1} parent=39 // pred_fallthru
          _
        // Predicated region
        $region45: #{tpu_custom_call.1} parent=39 // pred_check
          %p242 = pneg %p65
        $region46: #{tpu_custom_call.1} parent=39 // pred_check_branch
          %244 = sbr.rel (%p242) target = $region48
        $region47: #{tpu_custom_call.1} parent=39 // pred_region
          %245 = dma.done [#allocation6], 2048
        $region48: #{tpu_custom_call.1} parent=39 // pred_fallthru
          _
        // Predicated region
        $region49: #{tpu_custom_call.1} parent=39 // pred_check
          %p246 = pneg %p107
        $region50: #{tpu_custom_call.1} parent=39 // pred_check_branch
          %248 = sbr.rel (%p246) target = $region52
        $region51: #{tpu_custom_call.1} parent=39 // pred_region
          %249 = dma.done [#allocation6], 2048
        $region52: #{tpu_custom_call.1} parent=39 // pred_fallthru
          _
        %s250 = sand.u32 %s31, 1
        %s251 = scalar_lea.sflag [#allocation3], %s250
        %s252 = sand.u32 %s31, 1
        %s253 = smul.addr %s252, 16
        %s254 = scalar_lea.vmem [#allocation2], %s253
        %p255 = pneg %p44
        %p256 = pneg %p41
        %p257 = pneg %p65
        %p258 = pneg %p62
        %p259 = pneg %p86
        %p260 = pneg %p83
        %p261 = pneg %p107
        %p262 = pneg %p104
        %p263 = pneg %p128
        %p264 = pneg %p125
        %p265 = pneg %p154
        %p266 = pneg %p151
        %s267 = sand.u32 %s141, 1
        %s268 = scalar_lea.sflag [#allocation4], %s267
        %s269 = sand.u32 %s141, 1
        %s270 = smul.addr %s269, 16
        %s271 = scalar_lea.vmem [#allocation8], %s270
        %s272 = smul.u32 2, %s23
        %s273 = smul.u32 2, %s23
        %v274 = vld [vmem:[%s237] sm:$0xff]
        %v275 = vld [vmem:[%s237 + $0x8] sm:$0xff]
        %v276 = vld [vmem:[#allocation5] sm:$0xff]
        %v277 = vld [vmem:[#allocation5 + $0x8] sm:$0xff]
        %v278 = vld [vmem:[#allocation5 + $0x10] sm:$0xff]
        %v279 = vld [vmem:[#allocation5 + $0x18] sm:$0xff]
        %v280 = vld [vmem:[#allocation5 + $0x20] sm:$0xff]
        %v281 = vld [vmem:[#allocation5 + $0x28] sm:$0xff]
        %v282 = vld [vmem:[#allocation5 + $0x30] sm:$0xff]
        %v283 = vld [vmem:[#allocation5 + $0x38] sm:$0xff]
        %v284 = vld [vmem:[#allocation5 + $0x40] sm:$0xff]
        %v285 = vld [vmem:[#allocation5 + $0x48] sm:$0xff]
        %v286 = vld [vmem:[#allocation5 + $0x50] sm:$0xff]
        %v287 = vld [vmem:[#allocation5 + $0x58] sm:$0xff]
        %v288 = vld [vmem:[#allocation5 + $0x60] sm:$0xff]
        %v289 = vld [vmem:[#allocation5 + $0x68] sm:$0xff]
        %v290 = vld [vmem:[#allocation5 + $0x70] sm:$0xff]
        %v291 = vld [vmem:[#allocation5 + $0x78] sm:$0xff]
        %v292 = vld [vmem:[%s2] sm:$0x1]
        %v294 = vlaneseq
        %v295 = vshrl.u32 %v294, 7
        %v296 = vsub.s32 0, %v295
        %v297 = vrot.slane %v292, %v296
        %299 = vmatprep.subr.mxu0 0.0
        %300 = vmatpush1.msra.mxu0 %v276
        %301 = vmatprep.subr.mxu0 0.0
        %302 = vmatpush1.msra.mxu0 %v277
        %303 = vmatprep.subr.mxu0 0.0
        %304 = vmatpush1.msra.mxu0 %v278
        %305 = vmatprep.subr.mxu0 0.0
        %306 = vmatpush1.msra.mxu0 %v279
        %307 = vmatprep.subr.mxu0 0.0
        %308 = vmatpush1.msra.mxu0 %v280
        %309 = vmatprep.subr.mxu0 0.0
        %310 = vmatpush1.msra.mxu0 %v281
        %311 = vmatprep.subr.mxu0 0.0
        %312 = vmatpush1.msra.mxu0 %v282
        %313 = vmatprep.subr.mxu0 0.0
        %314 = vmatpush1.msra.mxu0 %v283
        %315 = vmatprep.subr.mxu0 0.0
        %316 = vmatpush1.msra.mxu0 %v284
        %317 = vmatprep.subr.mxu0 0.0
        %318 = vmatpush1.msra.mxu0 %v285
        %319 = vmatprep.subr.mxu0 0.0
        %320 = vmatpush1.msra.mxu0 %v286
        %321 = vmatprep.subr.mxu0 0.0
        %322 = vmatpush1.msra.mxu0 %v287
        %323 = vmatprep.subr.mxu0 0.0
        %324 = vmatpush1.msra.mxu0 %v288
        %325 = vmatprep.subr.mxu0 0.0
        %326 = vmatpush1.msra.mxu0 %v289
        %327 = vmatprep.subr.mxu0 0.0
        %328 = vmatpush1.msra.mxu0 %v290
        %329 = vmatprep.subr.mxu0 0.0
        %330 = vmatpush1.msra.mxu0 %v291
        %331 = vmatprep.subr.mxu0 0.0
        %332 = vmatpush1.msra.mxu0 0.0
        %333 = vmatprep.subr.mxu0 0.0
        %334 = vmatpush1.msra.mxu0 0.0
        %335 = vmatprep.subr.mxu0 0.0
        %336 = vmatpush1.msra.mxu0 0.0
        %337 = vmatprep.subr.mxu0 0.0
        %338 = vmatpush1.msra.mxu0 0.0
        %339 = vmatprep.subr.mxu0 0.0
        %340 = vmatpush1.msra.mxu0 0.0
        %341 = vmatprep.subr.mxu0 0.0
        %342 = vmatpush1.msra.mxu0 0.0
        %343 = vmatprep.subr.mxu0 0.0
        %344 = vmatpush1.msra.mxu0 0.0
        %345 = vmatprep.subr.mxu0 0.0
        %346 = vmatpush1.msra.mxu0 0.0
        %347 = vmatprep.subr.mxu0 0.0
        %348 = vmatpush1.msra.mxu0 0.0
        %349 = vmatprep.subr.mxu0 0.0
        %350 = vmatpush1.msra.mxu0 0.0
        %351 = vmatprep.subr.mxu0 0.0
        %352 = vmatpush1.msra.mxu0 0.0
        %353 = vmatprep.subr.mxu0 0.0
        %354 = vmatpush1.msra.mxu0 0.0
        %355 = vmatprep.subr.mxu0 0.0
        %356 = vmatpush1.msra.mxu0 0.0
        %357 = vmatprep.subr.mxu0 0.0
        %358 = vmatpush1.msra.mxu0 0.0
        %359 = vmatprep.subr.mxu0 0.0
        %360 = vmatpush1.msra.mxu0 0.0
        %361 = vmatprep.subr.mxu0 0.0
        %362 = vmatpush1.msra.mxu0 0.0
        %363 = vmatprep.mubr.f32.mxu0 0.0
        %364 = vmatmul.mubr.f32.gmra.mrb[0].mxu0 %v274
        %v365 = vpop.f32.mrb[0].mxu0
        %v366 = vadd.f32 %v297, %v365
        %v367 = vpop.f32.mrb[0].mxu0
        %368 = vmatprep.mubr.f32.mxu0 0.0
        %369 = vmatmul.mubr.f32.gmra.mrb[0].mxu0 %v275
        %v370 = vpop.f32.mrb[0].mxu0
        %v371 = vadd.f32 %v297, %v370
        %v372 = vpop.f32.mrb[0].mxu0
        %373 = vdwg.mxu0
        %v374 = vmul.f32 %v366, 0.5
        %v375 = vmul.f32 %v371, 0.5
        %v376 = vmul.f32 %v366, 0.70710677
        %v377 = vmul.f32 %v371, 0.70710677
        %v378 = vand.u32 2147483647, %v376
        %v379 = vand.u32 2147483647, %v377
        %v380 = vmul.f32 %v378, 0.3275911
        %v381 = vmul.f32 %v379, 0.3275911
        %v382 = vadd.f32 %v380, 1.0
        %v383 = vadd.f32 %v381, 1.0
        %v384 = vrcp.pop %v382
        %v385 = vmul.f32 1.0, %v384
        %v386 = vrcp.pop %v383
        %v387 = vmul.f32 1.0, %v386
        %v388 = vmul.f32 %v385, 1.0614054
        %v389 = vmul.f32 %v387, 1.0614054
        %v390 = vadd.f32 %v388, -1.4531521
        %v391 = vadd.f32 %v389, -1.4531521
        %v392 = vmul.f32 %v390, %v385
        %v393 = vmul.f32 %v391, %v387
        %v394 = vadd.f32 %v392, 1.4214138
        %v395 = vadd.f32 %v393, 1.4214138
        %v396 = vmul.f32 %v394, %v385
        %v397 = vmul.f32 %v395, %v387
        %v398 = vadd.f32 %v396, -0.28449672
        %v399 = vadd.f32 %v397, -0.28449672
        %v400 = vmul.f32 %v398, %v385
        %v401 = vmul.f32 %v399, %v387
        %v402 = vadd.f32 %v400, 0.2548296
        %v403 = vadd.f32 %v401, 0.2548296
        %v404 = vmul.f32 %v402, %v385
        %v405 = vmul.f32 %v403, %v387
        %v406 = vsub.f32 0.0, %v378
        %v407 = vsub.f32 0.0, %v379
        %v408 = vmul.f32 %v406, %v378
        %v409 = vmul.f32 %v407, %v379
        %v410 = vmul.f32 %v408, 1.442695
        %v411 = vpow.pop %v410
        %v412 = vmul.f32 %v409, 1.442695
        %v413 = vpow.pop %v412
        %v414 = vmul.f32 %v404, %v411
        %v415 = vmul.f32 %v405, %v413
        %vm416 = vcmp.ge.f32.partialorder %v376, 0.0
        %vm417 = vcmp.ge.f32.partialorder %v377, 0.0
        %v418 = vsub.f32 1.0, %v414
        %v419 = vsub.f32 1.0, %v415
        %v420 = vsub.f32 %v414, 1.0
        %v421 = vsub.f32 %v415, 1.0
        %v422 = vsel %vm416, %v418, %v420
        %v423 = vsel %vm417, %v419, %v421
        %v424 = vadd.f32 %v422, 1.0
        %v425 = vadd.f32 %v423, 1.0
        %v426 = vmul.f32 %v374, %v424
        %v427 = vmul.f32 %v375, %v425
        %v428 = vld [vmem:[#allocation7] sm:$0xff]
        %v429 = vld [vmem:[#allocation7 + $0x8] sm:$0xff]
        %v430 = vld [vmem:[#allocation7 + $0x10] sm:$0xff]
        %v431 = vld [vmem:[#allocation7 + $0x18] sm:$0xff]
        %v432 = vld [vmem:[#allocation7 + $0x20] sm:$0xff]
        %v433 = vld [vmem:[#allocation7 + $0x28] sm:$0xff]
        %v434 = vld [vmem:[#allocation7 + $0x30] sm:$0xff]
        %v435 = vld [vmem:[#allocation7 + $0x38] sm:$0xff]
        %v436 = vld [vmem:[#allocation7 + $0x40] sm:$0xff]
        %v437 = vld [vmem:[#allocation7 + $0x48] sm:$0xff]
        %v438 = vld [vmem:[#allocation7 + $0x50] sm:$0xff]
        %v439 = vld [vmem:[#allocation7 + $0x58] sm:$0xff]
        %v440 = vld [vmem:[#allocation7 + $0x60] sm:$0xff]
        %v441 = vld [vmem:[#allocation7 + $0x68] sm:$0xff]
        %v442 = vld [vmem:[#allocation7 + $0x70] sm:$0xff]
        %v443 = vld [vmem:[#allocation7 + $0x78] sm:$0xff]
        %v444 = vld [vmem:[%s4] sm:$0x1]
        %v446 = vlaneseq
        %v447 = vshrl.u32 %v446, 7
        %v448 = vsub.s32 0, %v447
        %v449 = vrot.slane %v444, %v448
        %451 = vmatprep.subr.mxu0 0.0
        %452 = vmatpush1.msra.mxu0 %v428
        %453 = vmatprep.subr.mxu0 0.0
        %454 = vmatpush1.msra.mxu0 %v429
        %455 = vmatprep.subr.mxu0 0.0
        %456 = vmatpush1.msra.mxu0 %v430
        %457 = vmatprep.subr.mxu0 0.0
        %458 = vmatpush1.msra.mxu0 %v431
        %459 = vmatprep.subr.mxu0 0.0
        %460 = vmatpush1.msra.mxu0 %v432
        %461 = vmatprep.subr.mxu0 0.0
        %462 = vmatpush1.msra.mxu0 %v433
        %463 = vmatprep.subr.mxu0 0.0
        %464 = vmatpush1.msra.mxu0 %v434
        %465 = vmatprep.subr.mxu0 0.0
        %466 = vmatpush1.msra.mxu0 %v435
        %467 = vmatprep.subr.mxu0 0.0
        %468 = vmatpush1.msra.mxu0 %v436
        %469 = vmatprep.subr.mxu0 0.0
        %470 = vmatpush1.msra.mxu0 %v437
        %471 = vmatprep.subr.mxu0 0.0
        %472 = vmatpush1.msra.mxu0 %v438
        %473 = vmatprep.subr.mxu0 0.0
        %474 = vmatpush1.msra.mxu0 %v439
        %475 = vmatprep.subr.mxu0 0.0
        %476 = vmatpush1.msra.mxu0 %v440
        %477 = vmatprep.subr.mxu0 0.0
        %478 = vmatpush1.msra.mxu0 %v441
        %479 = vmatprep.subr.mxu0 0.0
        %480 = vmatpush1.msra.mxu0 %v442
        %481 = vmatprep.subr.mxu0 0.0
        %482 = vmatpush1.msra.mxu0 %v443
        %483 = vmatprep.subr.mxu0 0.0
        %484 = vmatpush1.msra.mxu0 0.0
        %485 = vmatprep.subr.mxu0 0.0
        %486 = vmatpush1.msra.mxu0 0.0
        %487 = vmatprep.subr.mxu0 0.0
        %488 = vmatpush1.msra.mxu0 0.0
        %489 = vmatprep.subr.mxu0 0.0
        %490 = vmatpush1.msra.mxu0 0.0
        %491 = vmatprep.subr.mxu0 0.0
        %492 = vmatpush1.msra.mxu0 0.0
        %493 = vmatprep.subr.mxu0 0.0
        %494 = vmatpush1.msra.mxu0 0.0
        %495 = vmatprep.subr.mxu0 0.0
        %496 = vmatpush1.msra.mxu0 0.0
        %497 = vmatprep.subr.mxu0 0.0
        %498 = vmatpush1.msra.mxu0 0.0
        %499 = vmatprep.subr.mxu0 0.0
        %500 = vmatpush1.msra.mxu0 0.0
        %501 = vmatprep.subr.mxu0 0.0
        %502 = vmatpush1.msra.mxu0 0.0
        %503 = vmatprep.subr.mxu0 0.0
        %504 = vmatpush1.msra.mxu0 0.0
        %505 = vmatprep.subr.mxu0 0.0
        %506 = vmatpush1.msra.mxu0 0.0
        %507 = vmatprep.subr.mxu0 0.0
        %508 = vmatpush1.msra.mxu0 0.0
        %509 = vmatprep.subr.mxu0 0.0
        %510 = vmatpush1.msra.mxu0 0.0
        %511 = vmatprep.subr.mxu0 0.0
        %512 = vmatpush1.msra.mxu0 0.0
        %513 = vmatprep.subr.mxu0 0.0
        %514 = vmatpush1.msra.mxu0 0.0
        %515 = vmatprep.mubr.f32.mxu0 0.0
        %516 = vmatmul.mubr.f32.gmra.mrb[0].mxu0 %v426
        %v517 = vpop.f32.mrb[0].mxu0
        %v518 = vadd.f32 %v449, %v517
        %v519 = vpop.f32.mrb[0].mxu0
        %520 = vmatprep.mubr.f32.mxu0 0.0
        %521 = vmatmul.mubr.f32.gmra.mrb[0].mxu0 %v427
        %v522 = vpop.f32.mrb[0].mxu0
        %v523 = vadd.f32 %v449, %v522
        %v524 = vpop.f32.mrb[0].mxu0
        %525 = vdwg.mxu0
        %526 = vmax.xlane.f32.xlu0 %v518
        %v527 = vpop.xlane.xlu0 %526
        %528 = vmax.xlane.f32.xlu0 %v523
        %v529 = vpop.xlane.xlu0 %528
        %v530 = vsub.f32 %v518, %v527
        %v531 = vsub.f32 %v523, %v529
        %v532 = vmul.f32 %v530, 1.442695
        %v533 = vpow.pop %v532
        %v534 = vmul.f32 %v531, 1.442695
        %v535 = vpow.pop %v534
        %536 = vadd.xlane.f32.xlu0 %v533
        %v537 = vpop.xlane.xlu0 %536
        %538 = vadd.xlane.f32.xlu0 %v535
        %v539 = vpop.xlane.xlu0 %538
        %v540 = vrcp.pop %v537
        %v541 = vmul.f32 %v533, %v540
        %v542 = vrcp.pop %v539
        %v543 = vmul.f32 %v535, %v542
        %544 = vst [vmem:[%s271] sm:$0xff] %v541
        %545 = vst [vmem:[%s271 + $0x8] sm:$0xff] %v543
        %s546 = sand.u32 %s141, 1
        %s547 = scalar_lea.sflag [#allocation4], %s546
        %s548 = sand.u32 %s141, 1
        %s549 = smul.addr %s548, 16
        %s550 = scalar_lea.vmem [#allocation8], %s549
        // Predicated region
        $region53: #{tpu_custom_call.1} parent=39 // pred_check
          %p551 = pneg %p151
        $region54: #{tpu_custom_call.1} parent=39 // pred_check_branch
          %553 = sbr.rel (%p551) target = $region56
        $region55: #{tpu_custom_call.1} parent=39 // pred_region
          %s554 = smul.u32 2, %s23
          %s556 = ssub.s32 256, 256
          %557 = vsyncadd %s547, %s556
          %s558 = smul.addr %s554, 128
          %s559 = scalar_lea.hbm %s5, %s558
          %s560 = sshll.u32 %s550, 4
          %s561 = int_to_ptr.vmem [resolvable:$true] %s560
          %566 = dma.vmem_to_hbm [thread:$0]  %s561, 256, %s559, %s547, 128, 128, 8
        $region56: #{tpu_custom_call.1} parent=39 // pred_fallthru
          _
      $region40: #{tpu_custom_call.1} parent=5 // pred_fallthru
        _
      %p567 = scmp.le.s32.totalorder 2, %s18
      // Predicated region
      $region57: #{tpu_custom_call.1} parent=5 // pred_check
        %p568 = pneg %p567
      $region58: #{tpu_custom_call.1} parent=5 // pred_check_branch
        %570 = sbr.rel (%p568) target = $region60
      $region59: #{tpu_custom_call.1} parent=5 // pred_region
        %s571 = ssub.s32 %s18, 2
        // Predicated region
        $region61: #{tpu_custom_call.1} parent=59 // pred_check
          %p572 = pneg %p157
        $region62: #{tpu_custom_call.1} parent=59 // pred_check_branch
          %574 = sbr.rel (%p572) target = $region64
        $region63: #{tpu_custom_call.1} parent=59 // pred_region
          %s575 = sand.u32 %s142, 1
          %s576 = scalar_lea.sflag [#allocation4], %s575
          %s577 = sand.u32 %s142, 1
          %s578 = smul.addr %s577, 16
          %s579 = scalar_lea.vmem [#allocation8], %s578
          %580 = dma.done %s576, 256
        $region64: #{tpu_custom_call.1} parent=59 // pred_fallthru
          _
      $region60: #{tpu_custom_call.1} parent=5 // pred_fallthru
        _
    $region6: #{tpu_custom_call.1} parent=1 // loop_footer
      %s22 = sadd.s32 1, %s18
    $region7: #{tpu_custom_call.1} parent=1 // loop_footer_branch
      %17 = sbr.rel target = $region3
    $region8: #{tpu_custom_call.1} parent=1 // loop_exit
      _
    %581 = vsyncpa [#allocation3], 1
    %s582 = scalar_lea.sflag [#allocation3], 1
    %583 = vsyncpa %s582, 1
    %584 = vsyncpa [#allocation6], 1
    %585 = vsyncpa [#allocation4], 1
    %s586 = scalar_lea.sflag [#allocation4], 1
    %587 = vsyncpa %s586, 1

</llo_original>
